<compile_context>
chip_gen: v5e
topology: v5e:2x2
jax: 0.10.0
libtpu: 0.0.40
codegen_flags: <defaults>
</compile_context>

<pallas_src>
import functools

import jax
import jax.numpy as jnp
from jax.experimental import pallas as pl
from jax.experimental.pallas import tpu as pltpu


def _streaming_attention_kernel(x_ref, wqkv_ref, wo_ref, o_ref, *,
                                num_heads, head_dim):
    # Grid point: batch b.
    #   x_ref    : (L, D)          input sequence for batch b
    #   wqkv_ref : (3*H*Dh, D)     stacked [Wq*scale; Wk; Wv], native [out, in]
    #   wo_ref   : (D, H*Dh)       out_proj, native [out, in]
    #   o_ref    : (L, D)          output for batch b
    H, Dh = num_heads, head_dim
    HD = H * Dh

    x = x_ref[...]
    cdt = x.dtype                       # MXU operand dtype (bf16-native if bf16)
    dn_last = (((1,), (1,)), ((), ()))  # contract last dim of both operands

    # Single fused projection: (L, D) x (D, 3*H*Dh) -> (L, 3*H*Dh), f32 acc.
    qkv = jax.lax.dot_general(x, wqkv_ref[...], dn_last,
                              preferred_element_type=jnp.float32)

    q = qkv[:, 0 * HD:1 * HD].astype(cdt)   # scale already folded into weights
    k = qkv[:, 1 * HD:2 * HD].astype(cdt)
    v = qkv[:, 2 * HD:3 * HD].astype(cdt)

    # Per-head attention (the only part that is inherently head-blocked).
    # Static Python loop: H is a compile-time constant, unrolled for the LLO
    # scheduler.  Softmax is max-subtracted and computed in f32; exact divide
    # kept for parity with the reference (pl.reciprocal(approx=True) would be
    # free on the EUP but costs ~1e-3 accuracy).
    head_outs = []
    for h in range(H):
        sl = slice(h * Dh, (h + 1) * Dh)
        qh, kh, vh = q[:, sl], k[:, sl], v[:, sl]
        s = jax.lax.dot_general(qh, kh, dn_last,
                                preferred_element_type=jnp.float32)   # (L, L)
        m = jnp.max(s, axis=-1, keepdims=True)
        p = jnp.exp(s - m)
        l = jnp.sum(p, axis=-1, keepdims=True)
        ah = jnp.dot(p.astype(cdt), vh,
                     preferred_element_type=jnp.float32)              # (L, Dh)
        head_outs.append(ah / l)

    a = jnp.concatenate(head_outs, axis=-1).astype(cdt)               # (L, H*Dh)

    # Fused output projection over all heads: (L, H*Dh) x (H*Dh, D) -> (L, D),
    # contracting wo's last (in_features) dim -> no host-side transpose needed.
    o_ref[...] = jax.lax.dot_general(
        a, wo_ref[...], dn_last,
        preferred_element_type=jnp.float32).astype(o_ref.dtype)


def prepare_streaming_attention_weights(wq, wk, wv, wo, *, head_dim):
    """One-time host-side prep: fold scale into Wq and stack q/k/v weights.

    wq/wk/wv: [H*Dh, D] (PyTorch nn.Linear layout), wo: [D, H*Dh].
    Returns (wqkv [3*H*Dh, D], wo [D, H*Dh]).
    """
    scale = head_dim ** (-0.5)
    wqkv = jnp.concatenate([wq * scale, wk, wv], axis=0)
    return wqkv, wo


@functools.partial(jax.jit, static_argnames=("num_heads", "head_dim"))
def streaming_attention_forward(x, wqkv, wo, *, num_heads, head_dim):
    """x: [B, L, D]; wqkv: [3*H*Dh, D] (scale pre-folded); wo: [D, H*Dh]."""
    B, L, D = x.shape
    H, Dh = num_heads, head_dim
    HD3 = 3 * H * Dh

    flops = (2 * B * L * D * HD3           # fused q/k/v projection
             + 4 * B * H * L * L * Dh      # QK^T and PV
             + 2 * B * L * H * Dh * D)     # output projection
    # Weights are resident in VMEM across the batch grid -> counted once.
    bytes_accessed = (2 * B * L * D) * x.dtype.itemsize + \
        (wqkv.size + wo.size) * wqkv.dtype.itemsize
    cost = pl.CostEstimate(flops=flops,
                           transcendentals=B * H * L * L,
                           bytes_accessed=bytes_accessed)

    kernel = functools.partial(_streaming_attention_kernel,
                               num_heads=H, head_dim=Dh)

    return pl.pallas_call(
        kernel,
        out_shape=jax.ShapeDtypeStruct((B, L, D), x.dtype),
        grid_spec=pltpu.PrefetchScalarGridSpec(
            num_scalar_prefetch=0,
            grid=(B,),
            in_specs=[
                pl.BlockSpec((None, L, D), lambda b: (b, 0, 0)),   # x[b]
                pl.BlockSpec((HD3, D), lambda b: (0, 0)),          # Wqkv (resident)
                pl.BlockSpec((D, H * Dh), lambda b: (0, 0)),       # Wo   (resident)
            ],
            out_specs=pl.BlockSpec((None, L, D), lambda b: (b, 0, 0)),
        ),
        compiler_params=pltpu.CompilerParams(
            dimension_semantics=("parallel",)),
        cost_estimate=cost,
    )(x, wqkv, wo)


def streaming_attention_reference(x, wq, wk, wv, wo, *, num_heads, head_dim):
    B, L, D = x.shape
    hp = jax.lax.Precision.HIGHEST
    q = jnp.einsum("bld,ed->ble", x, wq, precision=hp)
    k = jnp.einsum("bld,ed->ble", x, wk, precision=hp)
    v = jnp.einsum("bld,ed->ble", x, wv, precision=hp)
    q = q.reshape(B, L, num_heads, head_dim).transpose(0, 2, 1, 3)
    k = k.reshape(B, L, num_heads, head_dim).transpose(0, 2, 1, 3)
    v = v.reshape(B, L, num_heads, head_dim).transpose(0, 2, 1, 3)
    s = jnp.einsum("bhqd,bhkd->bhqk", q, k, precision=hp) * (head_dim ** -0.5)
    p = jax.nn.softmax(s, axis=-1)
    a = jnp.einsum("bhqk,bhkd->bhqd", p, v, precision=hp)
    a = a.transpose(0, 2, 1, 3).reshape(B, L, num_heads * head_dim)
    return jnp.einsum("ble,de->bld", a, wo, precision=hp)


if __name__ == "__main__":
    # args: hidden_size=32, num_heads=4, head_dim=8, attention_dropout=0.0
    batch, seq, hidden = 2, 8, 32
    num_heads, head_dim = 4, 8
    inner = num_heads * head_dim

    key = jax.random.PRNGKey(0)
    kx, kq, kk, kv, ko = jax.random.split(key, 5)

    x = jax.random.normal(kx, (batch, seq, hidden), dtype=jnp.float32)
    # PyTorch nn.Linear default init: U(-1/sqrt(fan_in), 1/sqrt(fan_in))
    b_in = 1.0 / (hidden ** 0.5)
    b_out = 1.0 / (inner ** 0.5)
    wq = jax.random.uniform(kq, (inner, hidden), jnp.float32, -b_in, b_in)
    wk = jax.random.uniform(kk, (inner, hidden), jnp.float32, -b_in, b_in)
    wv = jax.random.uniform(kv, (inner, hidden), jnp.float32, -b_in, b_in)
    wo = jax.random.uniform(ko, (hidden, inner), jnp.float32, -b_out, b_out)

    # One-time host-side weight prep (outside jit): stack q/k/v, fold scale.
    wqkv, wo_n = prepare_streaming_attention_weights(wq, wk, wv, wo,
                                                     head_dim=head_dim)

    out = streaming_attention_forward(x, wqkv, wo_n,
                                      num_heads=num_heads, head_dim=head_dim)
    out = jax.block_until_ready(out)

    ref = streaming_attention_reference(x, wq, wk, wv, wo,
                                        num_heads=num_heads, head_dim=head_dim)
    assert out.shape == (batch, seq, hidden)
    assert jnp.allclose(out, ref, atol=1e-4, rtol=1e-4), "mismatch vs reference"

    print("KERNEL_OK")
</pallas_src>

<mosaic_0001>
module attributes {stable_mosaic.version = 11 : i64} {
  func.func @_streaming_attention_kernel(%arg0: i32, %arg1: memref<1x8x32xf32, #tpu.memory_space<vmem>>, %arg2: memref<96x32xf32, #tpu.memory_space<vmem>>, %arg3: memref<32x32xf32, #tpu.memory_space<vmem>>, %arg4: memref<1x8x32xf32, #tpu.memory_space<vmem>>) attributes {dimension_semantics = [#tpu.dimension_semantics<parallel>], iteration_bounds = array<i64: 2>, scalar_prefetch = 0 : i64, scratch_operands = 0 : i64, tpu.core_type = #tpu.core_type<tc>, window_params = [{transform_indices = @transform_0, window_bounds = array<i64: 1, 8, 32>}, {pipeline_mode = #tpu.pipeline_mode<synchronous>, transform_indices = @transform_1, window_bounds = array<i64: 96, 32>}, {pipeline_mode = #tpu.pipeline_mode<synchronous>, transform_indices = @transform_2, window_bounds = array<i64: 32, 32>}, {transform_indices = @transform_3, window_bounds = array<i64: 1, 8, 32>}]} {
    %c0 = arith.constant 0 : index
    %c0_0 = arith.constant 0 : index
    %c0_1 = arith.constant 0 : index
    %0 = vector.load %arg1[%c0, %c0_0, %c0_1] : memref<1x8x32xf32, #tpu.memory_space<vmem>>, vector<1x8x32xf32>
    %1 = vector.shape_cast %0 : vector<1x8x32xf32> to vector<8x32xf32>
    %c0_2 = arith.constant 0 : index
    %c0_3 = arith.constant 0 : index
    %2 = vector.load %arg2[%c0_2, %c0_3] : memref<96x32xf32, #tpu.memory_space<vmem>>, vector<96x32xf32>
    %cst = arith.constant dense<0.000000e+00> : vector<8x96xf32>
    %3 = tpu.matmul %1, %2, %cst {dimension_numbers = #tpu.dot_dimension_numbers<[1], [1], [0], [0], [0, 0, 1, 0], [], []>} : vector<8x32xf32>, vector<96x32xf32>, vector<8x96xf32> -> vector<8x96xf32>
    %4 = vector.extract_strided_slice %3 {offsets = [0, 0], sizes = [8, 32], strides = [1, 1]} : vector<8x96xf32> to vector<8x32xf32>
    %5 = vector.extract_strided_slice %3 {offsets = [0, 32], sizes = [8, 32], strides = [1, 1]} : vector<8x96xf32> to vector<8x32xf32>
    %6 = vector.extract_strided_slice %3 {offsets = [0, 64], sizes = [8, 32], strides = [1, 1]} : vector<8x96xf32> to vector<8x32xf32>
    %7 = vector.extract_strided_slice %4 {offsets = [0, 0], sizes = [8, 8], strides = [1, 1]} : vector<8x32xf32> to vector<8x8xf32>
    %8 = vector.extract_strided_slice %5 {offsets = [0, 0], sizes = [8, 8], strides = [1, 1]} : vector<8x32xf32> to vector<8x8xf32>
    %9 = vector.extract_strided_slice %6 {offsets = [0, 0], sizes = [8, 8], strides = [1, 1]} : vector<8x32xf32> to vector<8x8xf32>
    %cst_4 = arith.constant dense<0.000000e+00> : vector<8x8xf32>
    %10 = tpu.matmul %7, %8, %cst_4 {dimension_numbers = #tpu.dot_dimension_numbers<[1], [1], [0], [0], [0, 0, 1, 0], [], []>} : vector<8x8xf32>, vector<8x8xf32>, vector<8x8xf32> -> vector<8x8xf32>
    %cst_5 = arith.constant dense<0xFF800000> : vector<8xf32>
    %11 = vector.multi_reduction <maximumf>, %10, %cst_5 [1] : vector<8x8xf32> to vector<8xf32>
    %12 = vector.shape_cast %11 : vector<8xf32> to vector<8x1xf32>
    %13 = vector.broadcast %12 : vector<8x1xf32> to vector<8x8xf32>
    %14 = arith.subf %10, %13 : vector<8x8xf32>
    %15 = math.exp %14 : vector<8x8xf32>
    %cst_6 = arith.constant dense<0.000000e+00> : vector<8xf32>
    %16 = vector.multi_reduction <add>, %15, %cst_6 [1] : vector<8x8xf32> to vector<8xf32>
    %17 = vector.shape_cast %16 : vector<8xf32> to vector<8x1xf32>
    %cst_7 = arith.constant dense<0.000000e+00> : vector<8x8xf32>
    %18 = tpu.matmul %15, %9, %cst_7 {dimension_numbers = #tpu.dot_dimension_numbers<[1], [0], [0], [1], [0, 0, 1, 1], [], []>} : vector<8x8xf32>, vector<8x8xf32>, vector<8x8xf32> -> vector<8x8xf32>
    %19 = vector.broadcast %17 : vector<8x1xf32> to vector<8x8xf32>
    %20 = arith.divf %18, %19 : vector<8x8xf32>
    %21 = vector.extract_strided_slice %4 {offsets = [0, 8], sizes = [8, 8], strides = [1, 1]} : vector<8x32xf32> to vector<8x8xf32>
    %22 = vector.extract_strided_slice %5 {offsets = [0, 8], sizes = [8, 8], strides = [1, 1]} : vector<8x32xf32> to vector<8x8xf32>
    %23 = vector.extract_strided_slice %6 {offsets = [0, 8], sizes = [8, 8], strides = [1, 1]} : vector<8x32xf32> to vector<8x8xf32>
    %cst_8 = arith.constant dense<0.000000e+00> : vector<8x8xf32>
    %24 = tpu.matmul %21, %22, %cst_8 {dimension_numbers = #tpu.dot_dimension_numbers<[1], [1], [0], [0], [0, 0, 1, 0], [], []>} : vector<8x8xf32>, vector<8x8xf32>, vector<8x8xf32> -> vector<8x8xf32>
    %cst_9 = arith.constant dense<0xFF800000> : vector<8xf32>
    %25 = vector.multi_reduction <maximumf>, %24, %cst_9 [1] : vector<8x8xf32> to vector<8xf32>
    %26 = vector.shape_cast %25 : vector<8xf32> to vector<8x1xf32>
    %27 = vector.broadcast %26 : vector<8x1xf32> to vector<8x8xf32>
    %28 = arith.subf %24, %27 : vector<8x8xf32>
    %29 = math.exp %28 : vector<8x8xf32>
    %cst_10 = arith.constant dense<0.000000e+00> : vector<8xf32>
    %30 = vector.multi_reduction <add>, %29, %cst_10 [1] : vector<8x8xf32> to vector<8xf32>
    %31 = vector.shape_cast %30 : vector<8xf32> to vector<8x1xf32>
    %cst_11 = arith.constant dense<0.000000e+00> : vector<8x8xf32>
    %32 = tpu.matmul %29, %23, %cst_11 {dimension_numbers = #tpu.dot_dimension_numbers<[1], [0], [0], [1], [0, 0, 1, 1], [], []>} : vector<8x8xf32>, vector<8x8xf32>, vector<8x8xf32> -> vector<8x8xf32>
    %33 = vector.broadcast %31 : vector<8x1xf32> to vector<8x8xf32>
    %34 = arith.divf %32, %33 : vector<8x8xf32>
    %35 = vector.extract_strided_slice %4 {offsets = [0, 16], sizes = [8, 8], strides = [1, 1]} : vector<8x32xf32> to vector<8x8xf32>
    %36 = vector.extract_strided_slice %5 {offsets = [0, 16], sizes = [8, 8], strides = [1, 1]} : vector<8x32xf32> to vector<8x8xf32>
    %37 = vector.extract_strided_slice %6 {offsets = [0, 16], sizes = [8, 8], strides = [1, 1]} : vector<8x32xf32> to vector<8x8xf32>
    %cst_12 = arith.constant dense<0.000000e+00> : vector<8x8xf32>
    %38 = tpu.matmul %35, %36, %cst_12 {dimension_numbers = #tpu.dot_dimension_numbers<[1], [1], [0], [0], [0, 0, 1, 0], [], []>} : vector<8x8xf32>, vector<8x8xf32>, vector<8x8xf32> -> vector<8x8xf32>
    %cst_13 = arith.constant dense<0xFF800000> : vector<8xf32>
    %39 = vector.multi_reduction <maximumf>, %38, %cst_13 [1] : vector<8x8xf32> to vector<8xf32>
    %40 = vector.shape_cast %39 : vector<8xf32> to vector<8x1xf32>
    %41 = vector.broadcast %40 : vector<8x1xf32> to vector<8x8xf32>
    %42 = arith.subf %38, %41 : vector<8x8xf32>
    %43 = math.exp %42 : vector<8x8xf32>
    %cst_14 = arith.constant dense<0.000000e+00> : vector<8xf32>
    %44 = vector.multi_reduction <add>, %43, %cst_14 [1] : vector<8x8xf32> to vector<8xf32>
    %45 = vector.shape_cast %44 : vector<8xf32> to vector<8x1xf32>
    %cst_15 = arith.constant dense<0.000000e+00> : vector<8x8xf32>
    %46 = tpu.matmul %43, %37, %cst_15 {dimension_numbers = #tpu.dot_dimension_numbers<[1], [0], [0], [1], [0, 0, 1, 1], [], []>} : vector<8x8xf32>, vector<8x8xf32>, vector<8x8xf32> -> vector<8x8xf32>
    %47 = vector.broadcast %45 : vector<8x1xf32> to vector<8x8xf32>
    %48 = arith.divf %46, %47 : vector<8x8xf32>
    %49 = vector.extract_strided_slice %4 {offsets = [0, 24], sizes = [8, 8], strides = [1, 1]} : vector<8x32xf32> to vector<8x8xf32>
    %50 = vector.extract_strided_slice %5 {offsets = [0, 24], sizes = [8, 8], strides = [1, 1]} : vector<8x32xf32> to vector<8x8xf32>
    %51 = vector.extract_strided_slice %6 {offsets = [0, 24], sizes = [8, 8], strides = [1, 1]} : vector<8x32xf32> to vector<8x8xf32>
    %cst_16 = arith.constant dense<0.000000e+00> : vector<8x8xf32>
    %52 = tpu.matmul %49, %50, %cst_16 {dimension_numbers = #tpu.dot_dimension_numbers<[1], [1], [0], [0], [0, 0, 1, 0], [], []>} : vector<8x8xf32>, vector<8x8xf32>, vector<8x8xf32> -> vector<8x8xf32>
    %cst_17 = arith.constant dense<0xFF800000> : vector<8xf32>
    %53 = vector.multi_reduction <maximumf>, %52, %cst_17 [1] : vector<8x8xf32> to vector<8xf32>
    %54 = vector.shape_cast %53 : vector<8xf32> to vector<8x1xf32>
    %55 = vector.broadcast %54 : vector<8x1xf32> to vector<8x8xf32>
    %56 = arith.subf %52, %55 : vector<8x8xf32>
    %57 = math.exp %56 : vector<8x8xf32>
    %cst_18 = arith.constant dense<0.000000e+00> : vector<8xf32>
    %58 = vector.multi_reduction <add>, %57, %cst_18 [1] : vector<8x8xf32> to vector<8xf32>
    %59 = vector.shape_cast %58 : vector<8xf32> to vector<8x1xf32>
    %cst_19 = arith.constant dense<0.000000e+00> : vector<8x8xf32>
    %60 = tpu.matmul %57, %51, %cst_19 {dimension_numbers = #tpu.dot_dimension_numbers<[1], [0], [0], [1], [0, 0, 1, 1], [], []>} : vector<8x8xf32>, vector<8x8xf32>, vector<8x8xf32> -> vector<8x8xf32>
    %61 = vector.broadcast %59 : vector<8x1xf32> to vector<8x8xf32>
    %62 = arith.divf %60, %61 : vector<8x8xf32>
    %63 = tpu.concatenate %20, %34, %48, %62 in 1 : vector<8x8xf32>, vector<8x8xf32>, vector<8x8xf32>, vector<8x8xf32> -> vector<8x32xf32>
    %c0_20 = arith.constant 0 : index
    %c0_21 = arith.constant 0 : index
    %64 = vector.load %arg3[%c0_20, %c0_21] : memref<32x32xf32, #tpu.memory_space<vmem>>, vector<32x32xf32>
    %cst_22 = arith.constant dense<0.000000e+00> : vector<8x32xf32>
    %65 = tpu.matmul %63, %64, %cst_22 {dimension_numbers = #tpu.dot_dimension_numbers<[1], [1], [0], [0], [0, 0, 1, 0], [], []>} : vector<8x32xf32>, vector<32x32xf32>, vector<8x32xf32> -> vector<8x32xf32>
    %c0_23 = arith.constant 0 : index
    %c0_24 = arith.constant 0 : index
    %c0_25 = arith.constant 0 : index
    %66 = vector.load %arg4[%c0_23, %c0_24, %c0_25] : memref<1x8x32xf32, #tpu.memory_space<vmem>>, vector<1x8x32xf32>
    %67 = vector.shape_cast %66 : vector<1x8x32xf32> to vector<8x32xf32>
    %68 = vector.shape_cast %65 : vector<8x32xf32> to vector<1x8x32xf32>
    tpu.vector_store %arg4[%c0_23, %c0_24, %c0_25], %68 {strides = array<i32>} : memref<1x8x32xf32, #tpu.memory_space<vmem>>, vector<1x8x32xf32>,
    return
  }
  func.func @transform_0(%arg0: i32) -> (i32, i32, i32) {
    %c0_i32 = arith.constant 0 : i32
    %c0_i32_0 = arith.constant 0 : i32
    %c0_i32_1 = arith.constant 0 : i32
    return %arg0, %c0_i32, %c0_i32_0 : i32, i32, i32
  }
  func.func @transform_1(%arg0: i32) -> (i32, i32) {
    %c0_i32 = arith.constant 0 : i32
    %c0_i32_0 = arith.constant 0 : i32
    %c0_i32_1 = arith.constant 0 : i32
    return %c0_i32, %c0_i32_0 : i32, i32
  }
  func.func @transform_2(%arg0: i32) -> (i32, i32) {
    %c0_i32 = arith.constant 0 : i32
    %c0_i32_0 = arith.constant 0 : i32
    %c0_i32_1 = arith.constant 0 : i32
    return %c0_i32, %c0_i32_0 : i32, i32
  }
  func.func @transform_3(%arg0: i32) -> (i32, i32, i32) {
    %c0_i32 = arith.constant 0 : i32
    %c0_i32_0 = arith.constant 0 : i32
    %c0_i32_1 = arith.constant 0 : i32
    return %arg0, %c0_i32, %c0_i32_0 : i32, i32, i32
  }
}

</mosaic_0001>

<llo_original>
// kernel: streaming_attention_forward.1
$region0: #{streaming_attention_forward.1}
  #allocation0 [shape = 'u32[]', space=smem, size = 0x4, offset = 0x4, fixed_abs, tag = 'smem constant byte address 0x4 - core index']
  #allocation1 [shape = 'u32[72,128]{1,0:T(1,128)}', space=vmem, size = 0x9000, scoped, tag = 'internal scratch']
  %s0 = inlined_call_operand.vmem [shape: f32[2,8,32], index: 0, kind: input, shape index: {}]
  %s1 = inlined_call_operand.vmem [shape: f32[96,32], index: 1, kind: input, shape index: {}]
  %s2 = inlined_call_operand.vmem [shape: f32[32,32], index: 2, kind: input, shape index: {}]
  %s3 = inlined_call_operand.hbm [shape: f32[2,8,32], index: 3, kind: output, shape index: {}]
  %s4 = sld [smem:[#allocation0]]
  $region45: #{streaming_attention_forward.1} parent=0
    _
  %s6 = ssub.s32 1, %s4
  %s7 = scalar_select 0, %s6, %s4
  $region1: #{streaming_attention_forward.1} parent=0
    #allocation2 [shape = 'u8[8192]{0}', space=vmem, size = 0x2000, scoped, tag = 'output window, operand 0']
    #allocation3 [shape = 's32[2]{0}', space=sflag, size = 0x8, scoped, tag = 'scoped memory for streaming_attention_forward.1']
    %8 = vsyncpa [#allocation3], 0
    %s9 = scalar_lea.sflag [#allocation3], 1
    %10 = vsyncpa %s9, 0
    loop: start=0, step=1, limit=4
    $region2: #{streaming_attention_forward.1} parent=1 // loop_pre_header
      _
    $region3: #{streaming_attention_forward.1} parent=1 // loop_header
      %s12 = sphi 0, %s16
      %p13 = scmp.ge.s32.totalorder %s12, 4
      %s22 = sphi 0, %s24
      %s25 = sphi 0, %s22
      %s26 = sphi 0, %s25
      %s42 = sphi 0, %s26
      %s46 = sphi 0, %s46
      %s48 = sphi 0, %s46
      %s49 = sphi 0, %s48
      %s63 = sphi 0, %s49
      %s67 = sphi 0, %s67
      %s69 = sphi 0, %s67
      %s70 = sphi 0, %s69
      %s84 = sphi 0, %s70
      %s90 = sphi 0, %s92
      %s93 = sphi 0, %s90
      %s94 = sphi 0, %s93
      %s110 = sphi 0, %s94
    $region4: #{streaming_attention_forward.1} parent=1 // loop_header_branch
      %15 = sbr.rel (%p13) target = $region8
    $region5: #{streaming_attention_forward.1} parent=1 // loop_body
      %s17 = ssub.s32 %s12, 1
      %s18 = ssub.s32 %s12, 2
      %s19 = sadd.s32 %s12, 1
      %s20 = ssub.s32 %s12, %s19
      %p21 = scmp.eq.s32.totalorder %s20, 0
      %s23 = sadd.s32 %s22, 1
      %s24 = scalar_select %p21, %s22, %s23
      %p27 = pneg %p21
      %p28 = scmp.eq.s32.totalorder %s12, 1
      %p29 = por %p27, %p28
      %p30 = scmp.ne.s32.totalorder %s22, %s25
      %p31 = scmp.eq.s32.totalorder %s12, 0
      %p32 = por %p30, %p31
      %p33 = scmp.ne.s32.totalorder %s22, %s25
      %p34 = scmp.eq.s32.totalorder %s17, 1
      %p35 = por %p33, %p34
      %p36 = scmp.ne.s32.totalorder %s25, %s26
      %p37 = scmp.eq.s32.totalorder %s17, 0
      %p38 = por %p36, %p37
      %p39 = scmp.ne.s32.totalorder %s25, %s26
      %p40 = scmp.eq.s32.totalorder %s18, 1
      %p41 = por %p39, %p40
      %p43 = scmp.ne.s32.totalorder %s26, %s42
      %p44 = scmp.eq.s32.totalorder %s18, 0
      %p45 = por %p43, %p44
      %s47 = sadd.s32 %s46, 1
      %p50 = scmp.eq.s32.totalorder %s12, 1
      %p51 = scmp.ne.s32.totalorder %s46, %s48
      %p52 = scmp.eq.s32.totalorder %s12, 0
      %p53 = por %p51, %p52
      %p54 = scmp.ne.s32.totalorder %s46, %s48
      %p55 = scmp.eq.s32.totalorder %s17, 1
      %p56 = por %p54, %p55
      %p57 = scmp.ne.s32.totalorder %s48, %s49
      %p58 = scmp.eq.s32.totalorder %s17, 0
      %p59 = por %p57, %p58
      %p60 = scmp.ne.s32.totalorder %s48, %s49
      %p61 = scmp.eq.s32.totalorder %s18, 1
      %p62 = por %p60, %p61
      %p64 = scmp.ne.s32.totalorder %s49, %s63
      %p65 = scmp.eq.s32.totalorder %s18, 0
      %p66 = por %p64, %p65
      %s68 = sadd.s32 %s67, 1
      %p71 = scmp.eq.s32.totalorder %s12, 1
      %p72 = scmp.ne.s32.totalorder %s67, %s69
      %p73 = scmp.eq.s32.totalorder %s12, 0
      %p74 = por %p72, %p73
      %p75 = scmp.ne.s32.totalorder %s67, %s69
      %p76 = scmp.eq.s32.totalorder %s17, 1
      %p77 = por %p75, %p76
      %p78 = scmp.ne.s32.totalorder %s69, %s70
      %p79 = scmp.eq.s32.totalorder %s17, 0
      %p80 = por %p78, %p79
      %p81 = scmp.ne.s32.totalorder %s69, %s70
      %p82 = scmp.eq.s32.totalorder %s18, 1
      %p83 = por %p81, %p82
      %p85 = scmp.ne.s32.totalorder %s70, %s84
      %p86 = scmp.eq.s32.totalorder %s18, 0
      %p87 = por %p85, %p86
      %s88 = ssub.s32 %s12, %s19
      %p89 = scmp.eq.s32.totalorder %s88, 0
      %s91 = sadd.s32 %s90, 1
      %s92 = scalar_select %p89, %s90, %s91
      %p95 = pneg %p89
      %p96 = scmp.eq.s32.totalorder %s12, 1
      %p97 = por %p95, %p96
      %p98 = scmp.ne.s32.totalorder %s90, %s93
      %p99 = scmp.eq.s32.totalorder %s12, 0
      %p100 = por %p98, %p99
      %p101 = scmp.ne.s32.totalorder %s90, %s93
      %p102 = scmp.eq.s32.totalorder %s17, 1
      %p103 = por %p101, %p102
      %p104 = scmp.ne.s32.totalorder %s93, %s94
      %p105 = scmp.eq.s32.totalorder %s17, 0
      %p106 = por %p104, %p105
      %p107 = scmp.ne.s32.totalorder %s93, %s94
      %p108 = scmp.eq.s32.totalorder %s18, 1
      %p109 = por %p107, %p108
      %p111 = scmp.ne.s32.totalorder %s94, %s110
      %p112 = scmp.eq.s32.totalorder %s18, 0
      %p113 = por %p111, %p112
      %p114 = scmp.le.s32.totalorder 1, %s12
      %p115 = scmp.lt.s32.totalorder %s12, 3
      %p116 = pnand %p114, %p115
      %p117 = pneg %p116
      // Predicated region
      $region9: #{streaming_attention_forward.1} parent=5 // pred_check
        _
      $region10: #{streaming_attention_forward.1} parent=5 // pred_check_branch
        %119 = sbr.rel (%p116) target = $region12
      $region11: #{streaming_attention_forward.1} parent=5 // pred_region
        %s120 = ssub.s32 %s12, 1
        // Predicated region
        $region13: #{streaming_attention_forward.1} parent=11 // pred_check
          %p121 = pneg %p59
        $region14: #{streaming_attention_forward.1} parent=11 // pred_check_branch
          %123 = sbr.rel (%p121) target = $region16
        $region15: #{streaming_attention_forward.1} parent=11 // pred_region
          _
        $region16: #{streaming_attention_forward.1} parent=11 // pred_fallthru
          _
        // Predicated region
        $region17: #{streaming_attention_forward.1} parent=11 // pred_check
          %p124 = pneg %p80
        $region18: #{streaming_attention_forward.1} parent=11 // pred_check_branch
          %126 = sbr.rel (%p124) target = $region20
        $region19: #{streaming_attention_forward.1} parent=11 // pred_region
          _
        $region20: #{streaming_attention_forward.1} parent=11 // pred_fallthru
          _
      $region12: #{streaming_attention_forward.1} parent=5 // pred_fallthru
        _
      %p127 = scmp.lt.s32.totalorder %s12, 2
      // Predicated region
      $region21: #{streaming_attention_forward.1} parent=5 // pred_check
        %p128 = pneg %p127
      $region22: #{streaming_attention_forward.1} parent=5 // pred_check_branch
        %130 = sbr.rel (%p128) target = $region24
      $region23: #{streaming_attention_forward.1} parent=5 // pred_region
        // Predicated region
        $region25: #{streaming_attention_forward.1} parent=23 // pred_check
          %p131 = pneg %p32
        $region26: #{streaming_attention_forward.1} parent=23 // pred_check_branch
          %133 = sbr.rel (%p131) target = $region28
        $region27: #{streaming_attention_forward.1} parent=23 // pred_region
          %p134 = scmp.lt.s32.totalorder %s12, 1
          %s135 = scalar_select %p134, %s12, 1
          %s136 = smul.addr %s135, 8
          %s137 = scalar_lea.vmem %s0, %s136
        $region28: #{streaming_attention_forward.1} parent=23 // pred_fallthru
          _
      $region24: #{streaming_attention_forward.1} parent=5 // pred_fallthru
        _
      %p138 = scmp.le.s32.totalorder 1, %s12
      %p139 = scmp.lt.s32.totalorder %s12, 3
      %p140 = pnand %p138, %p139
      %p141 = pneg %p140
      // Predicated region
      $region29: #{streaming_attention_forward.1} parent=5 // pred_check
        _
      $region30: #{streaming_attention_forward.1} parent=5 // pred_check_branch
        %143 = sbr.rel (%p140) target = $region32
      $region31: #{streaming_attention_forward.1} parent=5 // pred_region
        %s144 = ssub.s32 %s12, 1
        %p145 = scmp.lt.s32.totalorder %s17, 1
        %s146 = scalar_select %p145, %s17, 1
        %s147 = smul.addr %s146, 8
        %s148 = scalar_lea.vmem %s0, %s147
        %p149 = pneg %p38
        %p150 = pneg %p35
        %p151 = pneg %p59
        %p152 = pneg %p56
        %p153 = pneg %p80
        %p154 = pneg %p77
        %p155 = pneg %p106
        %p156 = pneg %p103
        %s157 = sand.u32 %s93, 1
        %s158 = scalar_lea.sflag [#allocation3], %s157
        %s159 = sand.u32 %s93, 1
        %s160 = smul.addr %s159, 8
        %s161 = scalar_lea.vmem [#allocation2], %s160
        %p162 = scmp.lt.s32.totalorder %s17, 1
        %s163 = scalar_select %p162, %s17, 1
        %s164 = smul.addr %s163, 8
        %s165 = scalar_lea.vmem %s0, %s164
        %v166 = vld [vmem:[%s165] sm:$0xff]
        %v167 = vld [vmem:[%s1] sm:$0xff]
        %v168 = vld [vmem:[%s1 + $0x8] sm:$0xff]
        %v169 = vld [vmem:[%s1 + $0x10] sm:$0xff]
        %v170 = vld [vmem:[%s1 + $0x18] sm:$0xff]
        %v171 = vld [vmem:[%s1 + $0x20] sm:$0xff]
        %v172 = vld [vmem:[%s1 + $0x28] sm:$0xff]
        %v173 = vld [vmem:[%s1 + $0x30] sm:$0xff]
        %v174 = vld [vmem:[%s1 + $0x38] sm:$0xff]
        %v175 = vld [vmem:[%s1 + $0x40] sm:$0xff]
        %v176 = vld [vmem:[%s1 + $0x48] sm:$0xff]
        %v177 = vld [vmem:[%s1 + $0x50] sm:$0xff]
        %v178 = vld [vmem:[%s1 + $0x58] sm:$0xff]
        %vm179 = vcmask 261120
        %v181 = vsel %vm179, %v166, 0
        %v184 = vsel %vm179, %v167, 0
        %v187 = vsel %vm179, %v168, 0
        %v190 = vsel %vm179, %v169, 0
        %v193 = vsel %vm179, %v170, 0
        %v196 = vsel %vm179, %v171, 0
        %v199 = vsel %vm179, %v172, 0
        %v202 = vsel %vm179, %v173, 0
        %v205 = vsel %vm179, %v174, 0
        %v208 = vsel %vm179, %v175, 0
        %v211 = vsel %vm179, %v176, 0
        %v214 = vsel %vm179, %v177, 0
        %v217 = vsel %vm179, %v178, 0
        %219 = vmatpush.xpose.msra.mxu0 0.0
        %220 = vmatpush.xpose.msra.mxu0 0.0
        %221 = vmatpush.xpose.msra.mxu0 0.0
        %222 = vmatpush.xpose.msra.mxu0 0.0
        %223 = vmatpush.xpose.msra.mxu0 %v217
        %224 = vmatpush.xpose.msra.mxu0 %v214
        %225 = vmatpush.xpose.msra.mxu0 %v211
        %226 = vmatpush.xpose.msra.mxu0 %v208
        %227 = vmatpush.xpose.msra.mxu0 %v205
        %228 = vmatpush.xpose.msra.mxu0 %v202
        %229 = vmatpush.xpose.msra.mxu0 %v199
        %230 = vmatpush.xpose.msra.mxu0 %v196
        %231 = vmatpush.xpose.msra.mxu0 %v193
        %232 = vmatpush.xpose.msra.mxu0 %v190
        %233 = vmatpush.xpose.msra.mxu0 %v187
        %234 = vmatpush.xpose.msra.mxu0 %v184
        %235 = vmatmul.f32.gmra.mxu0 %v181
        %v236 = vpop.f32.mrf.mxu0
        %v237 = vadd.f32 0.0, %v236
        %238 = vdwg.mxu0
        %240 = vrot.lane.b32.xlu0 %v237, 96
        %v241 = vpop.permute.xlu0 %240
        %vm242 = vcmask 64512
        %v243 = vsel %vm242, %v237, 0
        %v245 = vsel %vm242, %v241, 0
        %247 = vmatpush.xpose.msra.mxu0 0.0
        %248 = vmatpush.xpose.msra.mxu0 0.0
        %249 = vmatpush.xpose.msra.mxu0 0.0
        %250 = vmatpush.xpose.msra.mxu0 0.0
        %251 = vmatpush.xpose.msra.mxu0 0.0
        %252 = vmatpush.xpose.msra.mxu0 0.0
        %253 = vmatpush.xpose.msra.mxu0 0.0
        %254 = vmatpush.xpose.msra.mxu0 0.0
        %255 = vmatpush.xpose.msra.mxu0 0.0
        %256 = vmatpush.xpose.msra.mxu0 0.0
        %257 = vmatpush.xpose.msra.mxu0 0.0
        %258 = vmatpush.xpose.msra.mxu0 0.0
        %259 = vmatpush.xpose.msra.mxu0 0.0
        %260 = vmatpush.xpose.msra.mxu0 0.0
        %261 = vmatpush.xpose.msra.mxu0 0.0
        %262 = vmatpush.xpose.msra.mxu0 %v245
        %263 = vmatmul.f32.gmra.mxu0 %v243
        %v264 = vpop.f32.mrf.mxu0
        %v265 = vadd.f32 0.0, %v264
        %266 = vdwg.mxu0
        %v267 = vsel %vm242, %v265, -inf
        %268 = vmax.xlane.f32.xlu0 %v267
        %v269 = vpop.xlane.xlu0 %268
        %v270 = vsub.f32 %v265, %v269
        %v271 = vmul.f32 %v270, 1.442695
        %v272 = vpow.pop %v271
        %v273 = vsel %vm242, %v272, 0.0
        %274 = vadd.xlane.f32.xlu0 %v273
        %v275 = vpop.xlane.xlu0 %274
        %276 = vrot.lane.b32.xlu0 %v237, 64
        %v277 = vpop.permute.xlu0 %276
        %v280 = vsel %vm242, %v272, 0
        %282 = vmatpush.msra.mxu0 0.0
        %283 = vmatpush.msra.mxu0 0.0
        %284 = vmatpush.msra.mxu0 0.0
        %285 = vmatpush.msra.mxu0 0.0
        %286 = vmatpush.msra.mxu0 0.0
        %287 = vmatpush.msra.mxu0 0.0
        %288 = vmatpush.msra.mxu0 0.0
        %289 = vmatpush.msra.mxu0 0.0
        %290 = vmatpush.msra.mxu0 0.0
        %291 = vmatpush.msra.mxu0 0.0
        %292 = vmatpush.msra.mxu0 0.0
        %293 = vmatpush.msra.mxu0 0.0
        %294 = vmatpush.msra.mxu0 0.0
        %295 = vmatpush.msra.mxu0 0.0
        %296 = vmatpush.msra.mxu0 0.0
        %297 = vmatpush.msra.mxu0 %v277
        %298 = vmatmul.f32.gmra.mxu0 %v280
        %v299 = vpop.f32.mrf.mxu0
        %v300 = vadd.f32 0.0, %v299
        %301 = vdwg.mxu0
        %v302 = vrcp.pop %v275
        %v303 = vmul.f32 %v275, %v302
        %v304 = vsub.f32 1.0, %v303
        %v305 = vmul.f32 %v302, %v304
        %v306 = vadd.f32 %v302, %v305
        %vm307 = vweird.f32 %v275
        %vm308 = vweird.f32 %v302
        %vm309 = vmor %vm307, %vm308
        %v310 = vsel %vm309, %v302, %v306
        %v311 = vand.u32 2147483647, %v275
        %vm312 = vcmp.eq.f32.partialorder %v311, 8.507059e+37
        %v313 = vand.u32 %v275, 2147483648
        %v314 = vor.u32 1.1754944e-38, %v313
        %v315 = vsel %vm312, %v314, %v310
        %v316 = vmul.f32 %v300, %v315
        %317 = vrot.lane.b32.xlu0 %v237, 120
        %v318 = vpop.permute.xlu0 %317
        %319 = vrot.lane.b32.xlu0 %v237, 88
        %v320 = vpop.permute.xlu0 %319
        %v321 = vsel %vm242, %v318, 0
        %v323 = vsel %vm242, %v320, 0
        %325 = vmatpush.xpose.msra.mxu0 0.0
        %326 = vmatpush.xpose.msra.mxu0 0.0
        %327 = vmatpush.xpose.msra.mxu0 0.0
        %328 = vmatpush.xpose.msra.mxu0 0.0
        %329 = vmatpush.xpose.msra.mxu0 0.0
        %330 = vmatpush.xpose.msra.mxu0 0.0
        %331 = vmatpush.xpose.msra.mxu0 0.0
        %332 = vmatpush.xpose.msra.mxu0 0.0
        %333 = vmatpush.xpose.msra.mxu0 0.0
        %334 = vmatpush.xpose.msra.mxu0 0.0
        %335 = vmatpush.xpose.msra.mxu0 0.0
        %336 = vmatpush.xpose.msra.mxu0 0.0
        %337 = vmatpush.xpose.msra.mxu0 0.0
        %338 = vmatpush.xpose.msra.mxu0 0.0
        %339 = vmatpush.xpose.msra.mxu0 0.0
        %340 = vmatpush.xpose.msra.mxu0 %v323
        %341 = vmatmul.f32.gmra.mxu0 %v321
        %v342 = vpop.f32.mrf.mxu0
        %v343 = vadd.f32 0.0, %v342
        %344 = vdwg.mxu0
        %v345 = vsel %vm242, %v343, -inf
        %346 = vmax.xlane.f32.xlu0 %v345
        %v347 = vpop.xlane.xlu0 %346
        %v348 = vsub.f32 %v343, %v347
        %v349 = vmul.f32 %v348, 1.442695
        %v350 = vpow.pop %v349
        %v351 = vsel %vm242, %v350, 0.0
        %352 = vadd.xlane.f32.xlu0 %v351
        %v353 = vpop.xlane.xlu0 %352
        %354 = vrot.lane.b32.xlu0 %v237, 56
        %v355 = vpop.permute.xlu0 %354
        %v358 = vsel %vm242, %v350, 0
        %360 = vmatpush.msra.mxu0 0.0
        %361 = vmatpush.msra.mxu0 0.0
        %362 = vmatpush.msra.mxu0 0.0
        %363 = vmatpush.msra.mxu0 0.0
        %364 = vmatpush.msra.mxu0 0.0
        %365 = vmatpush.msra.mxu0 0.0
        %366 = vmatpush.msra.mxu0 0.0
        %367 = vmatpush.msra.mxu0 0.0
        %368 = vmatpush.msra.mxu0 0.0
        %369 = vmatpush.msra.mxu0 0.0
        %370 = vmatpush.msra.mxu0 0.0
        %371 = vmatpush.msra.mxu0 0.0
        %372 = vmatpush.msra.mxu0 0.0
        %373 = vmatpush.msra.mxu0 0.0
        %374 = vmatpush.msra.mxu0 0.0
        %375 = vmatpush.msra.mxu0 %v355
        %376 = vmatmul.f32.gmra.mxu0 %v358
        %v377 = vpop.f32.mrf.mxu0
        %v378 = vadd.f32 0.0, %v377
        %379 = vdwg.mxu0
        %v380 = vrcp.pop %v353
        %v381 = vmul.f32 %v353, %v380
        %v382 = vsub.f32 1.0, %v381
        %v383 = vmul.f32 %v380, %v382
        %v384 = vadd.f32 %v380, %v383
        %vm385 = vweird.f32 %v353
        %vm386 = vweird.f32 %v380
        %vm387 = vmor %vm385, %vm386
        %v388 = vsel %vm387, %v380, %v384
        %v389 = vand.u32 2147483647, %v353
        %vm390 = vcmp.eq.f32.partialorder %v389, 8.507059e+37
        %v391 = vand.u32 %v353, 2147483648
        %v392 = vor.u32 1.1754944e-38, %v391
        %v393 = vsel %vm390, %v392, %v388
        %v394 = vmul.f32 %v378, %v393
        %395 = vrot.lane.b32.xlu0 %v237, 112
        %v396 = vpop.permute.xlu0 %395
        %397 = vrot.lane.b32.xlu0 %v237, 80
        %v398 = vpop.permute.xlu0 %397
        %v399 = vsel %vm242, %v396, 0
        %v401 = vsel %vm242, %v398, 0
        %403 = vmatpush.xpose.msra.mxu0 0.0
        %404 = vmatpush.xpose.msra.mxu0 0.0
        %405 = vmatpush.xpose.msra.mxu0 0.0
        %406 = vmatpush.xpose.msra.mxu0 0.0
        %407 = vmatpush.xpose.msra.mxu0 0.0
        %408 = vmatpush.xpose.msra.mxu0 0.0
        %409 = vmatpush.xpose.msra.mxu0 0.0
        %410 = vmatpush.xpose.msra.mxu0 0.0
        %411 = vmatpush.xpose.msra.mxu0 0.0
        %412 = vmatpush.xpose.msra.mxu0 0.0
        %413 = vmatpush.xpose.msra.mxu0 0.0
        %414 = vmatpush.xpose.msra.mxu0 0.0
        %415 = vmatpush.xpose.msra.mxu0 0.0
        %416 = vmatpush.xpose.msra.mxu0 0.0
        %417 = vmatpush.xpose.msra.mxu0 0.0
        %418 = vmatpush.xpose.msra.mxu0 %v401
        %419 = vmatmul.f32.gmra.mxu0 %v399
        %v420 = vpop.f32.mrf.mxu0
        %v421 = vadd.f32 0.0, %v420
        %422 = vdwg.mxu0
        %v423 = vsel %vm242, %v421, -inf
        %424 = vmax.xlane.f32.xlu0 %v423
        %v425 = vpop.xlane.xlu0 %424
        %v426 = vsub.f32 %v421, %v425
        %v427 = vmul.f32 %v426, 1.442695
        %v428 = vpow.pop %v427
        %v429 = vsel %vm242, %v428, 0.0
        %430 = vadd.xlane.f32.xlu0 %v429
        %v431 = vpop.xlane.xlu0 %430
        %432 = vrot.lane.b32.xlu0 %v237, 48
        %v433 = vpop.permute.xlu0 %432
        %v436 = vsel %vm242, %v428, 0
        %438 = vmatpush.msra.mxu0 0.0
        %439 = vmatpush.msra.mxu0 0.0
        %440 = vmatpush.msra.mxu0 0.0
        %441 = vmatpush.msra.mxu0 0.0
        %442 = vmatpush.msra.mxu0 0.0
        %443 = vmatpush.msra.mxu0 0.0
        %444 = vmatpush.msra.mxu0 0.0
        %445 = vmatpush.msra.mxu0 0.0
        %446 = vmatpush.msra.mxu0 0.0
        %447 = vmatpush.msra.mxu0 0.0
        %448 = vmatpush.msra.mxu0 0.0
        %449 = vmatpush.msra.mxu0 0.0
        %450 = vmatpush.msra.mxu0 0.0
        %451 = vmatpush.msra.mxu0 0.0
        %452 = vmatpush.msra.mxu0 0.0
        %453 = vmatpush.msra.mxu0 %v433
        %454 = vmatmul.f32.gmra.mxu0 %v436
        %v455 = vpop.f32.mrf.mxu0
        %v456 = vadd.f32 0.0, %v455
        %457 = vdwg.mxu0
        %v458 = vrcp.pop %v431
        %v459 = vmul.f32 %v431, %v458
        %v460 = vsub.f32 1.0, %v459
        %v461 = vmul.f32 %v458, %v460
        %v462 = vadd.f32 %v458, %v461
        %vm463 = vweird.f32 %v431
        %vm464 = vweird.f32 %v458
        %vm465 = vmor %vm463, %vm464
        %v466 = vsel %vm465, %v458, %v462
        %v467 = vand.u32 2147483647, %v431
        %vm468 = vcmp.eq.f32.partialorder %v467, 8.507059e+37
        %v469 = vand.u32 %v431, 2147483648
        %v470 = vor.u32 1.1754944e-38, %v469
        %v471 = vsel %vm468, %v470, %v466
        %v472 = vmul.f32 %v456, %v471
        %473 = vrot.lane.b32.xlu0 %v237, 104
        %v474 = vpop.permute.xlu0 %473
        %475 = vrot.lane.b32.xlu0 %v237, 72
        %v476 = vpop.permute.xlu0 %475
        %v477 = vsel %vm242, %v474, 0
        %v479 = vsel %vm242, %v476, 0
        %481 = vmatpush.xpose.msra.mxu0 0.0
        %482 = vmatpush.xpose.msra.mxu0 0.0
        %483 = vmatpush.xpose.msra.mxu0 0.0
        %484 = vmatpush.xpose.msra.mxu0 0.0
        %485 = vmatpush.xpose.msra.mxu0 0.0
        %486 = vmatpush.xpose.msra.mxu0 0.0
        %487 = vmatpush.xpose.msra.mxu0 0.0
        %488 = vmatpush.xpose.msra.mxu0 0.0
        %489 = vmatpush.xpose.msra.mxu0 0.0
        %490 = vmatpush.xpose.msra.mxu0 0.0
        %491 = vmatpush.xpose.msra.mxu0 0.0
        %492 = vmatpush.xpose.msra.mxu0 0.0
        %493 = vmatpush.xpose.msra.mxu0 0.0
        %494 = vmatpush.xpose.msra.mxu0 0.0
        %495 = vmatpush.xpose.msra.mxu0 0.0
        %496 = vmatpush.xpose.msra.mxu0 %v479
        %497 = vmatmul.f32.gmra.mxu0 %v477
        %v498 = vpop.f32.mrf.mxu0
        %v499 = vadd.f32 0.0, %v498
        %500 = vdwg.mxu0
        %v501 = vsel %vm242, %v499, -inf
        %502 = vmax.xlane.f32.xlu0 %v501
        %v503 = vpop.xlane.xlu0 %502
        %v504 = vsub.f32 %v499, %v503
        %v505 = vmul.f32 %v504, 1.442695
        %v506 = vpow.pop %v505
        %v507 = vsel %vm242, %v506, 0.0
        %508 = vadd.xlane.f32.xlu0 %v507
        %v509 = vpop.xlane.xlu0 %508
        %510 = vrot.lane.b32.xlu0 %v237, 40
        %v511 = vpop.permute.xlu0 %510
        %v514 = vsel %vm242, %v506, 0
        %516 = vmatpush.msra.mxu0 0.0
        %517 = vmatpush.msra.mxu0 0.0
        %518 = vmatpush.msra.mxu0 0.0
        %519 = vmatpush.msra.mxu0 0.0
        %520 = vmatpush.msra.mxu0 0.0
        %521 = vmatpush.msra.mxu0 0.0
        %522 = vmatpush.msra.mxu0 0.0
        %523 = vmatpush.msra.mxu0 0.0
        %524 = vmatpush.msra.mxu0 0.0
        %525 = vmatpush.msra.mxu0 0.0
        %526 = vmatpush.msra.mxu0 0.0
        %527 = vmatpush.msra.mxu0 0.0
        %528 = vmatpush.msra.mxu0 0.0
        %529 = vmatpush.msra.mxu0 0.0
        %530 = vmatpush.msra.mxu0 0.0
        %531 = vmatpush.msra.mxu0 %v511
        %532 = vmatmul.f32.gmra.mxu0 %v514
        %v533 = vpop.f32.mrf.mxu0
        %v534 = vadd.f32 0.0, %v533
        %535 = vdwg.mxu0
        %v536 = vrcp.pop %v509
        %v537 = vmul.f32 %v509, %v536
        %v538 = vsub.f32 1.0, %v537
        %v539 = vmul.f32 %v536, %v538
        %v540 = vadd.f32 %v536, %v539
        %vm541 = vweird.f32 %v509
        %vm542 = vweird.f32 %v536
        %vm543 = vmor %vm541, %vm542
        %v544 = vsel %vm543, %v536, %v540
        %v545 = vand.u32 2147483647, %v509
        %vm546 = vcmp.eq.f32.partialorder %v545, 8.507059e+37
        %v547 = vand.u32 %v509, 2147483648
        %v548 = vor.u32 1.1754944e-38, %v547
        %v549 = vsel %vm546, %v548, %v544
        %v550 = vmul.f32 %v534, %v549
        %552 = vrot.lane.b32.xlu0 %v394, 8
        %v553 = vpop.permute.xlu0 %552
        %556 = vrot.lane.b32.xlu0 %v472, 16
        %v557 = vpop.permute.xlu0 %556
        %560 = vrot.lane.b32.xlu0 %v550, 24
        %v561 = vpop.permute.xlu0 %560
        %v563 = vsel %vm242, %v316, %v553
        %vm564 = vcmask 130048
        %v565 = vsel %vm564, %v563, %v557
        %vm566 = vcmask 195584
        %v567 = vsel %vm566, %v565, %v561
        %v568 = vld [vmem:[%s2] sm:$0xff]
        %v569 = vld [vmem:[%s2 + $0x8] sm:$0xff]
        %v570 = vld [vmem:[%s2 + $0x10] sm:$0xff]
        %v571 = vld [vmem:[%s2 + $0x18] sm:$0xff]
        %v573 = vsel %vm179, %v567, 0
        %v576 = vsel %vm179, %v568, 0
        %v579 = vsel %vm179, %v569, 0
        %v582 = vsel %vm179, %v570, 0
        %v585 = vsel %vm179, %v571, 0
        %587 = vmatpush.xpose.msra.mxu0 0.0
        %588 = vmatpush.xpose.msra.mxu0 0.0
        %589 = vmatpush.xpose.msra.mxu0 0.0
        %590 = vmatpush.xpose.msra.mxu0 0.0
        %591 = vmatpush.xpose.msra.mxu0 0.0
        %592 = vmatpush.xpose.msra.mxu0 0.0
        %593 = vmatpush.xpose.msra.mxu0 0.0
        %594 = vmatpush.xpose.msra.mxu0 0.0
        %595 = vmatpush.xpose.msra.mxu0 0.0
        %596 = vmatpush.xpose.msra.mxu0 0.0
        %597 = vmatpush.xpose.msra.mxu0 0.0
        %598 = vmatpush.xpose.msra.mxu0 0.0
        %599 = vmatpush.xpose.msra.mxu0 %v585
        %600 = vmatpush.xpose.msra.mxu0 %v582
        %601 = vmatpush.xpose.msra.mxu0 %v579
        %602 = vmatpush.xpose.msra.mxu0 %v576
        %603 = vmatmul.f32.gmra.mxu0 %v573
        %v604 = vpop.f32.mrf.mxu0
        %v605 = vadd.f32 0.0, %v604
        %606 = vdwg.mxu0
        %607 = vst.msk [vmem:[%s161] sm:$0xff] %vm179, %v605
        %s608 = sand.u32 %s93, 1
        %s609 = scalar_lea.sflag [#allocation3], %s608
        %s610 = sand.u32 %s93, 1
        %s611 = smul.addr %s610, 8
        %s612 = scalar_lea.vmem [#allocation2], %s611
        // Predicated region
        $region33: #{streaming_attention_forward.1} parent=31 // pred_check
          %p613 = pneg %p103
        $region34: #{streaming_attention_forward.1} parent=31 // pred_check_branch
          %615 = sbr.rel (%p613) target = $region36
        $region35: #{streaming_attention_forward.1} parent=31 // pred_region
          %617 = vsyncadd %s609, 0
          %s618 = smul.addr %s17, 8
          %s619 = scalar_lea.hbm %s3, %s618
          %s621 = sshll.u32 %s612, 4
          %s622 = int_to_ptr.vmem [resolvable:$true] %s621
          %s623 = sshll.u32 %s619, 4
          %s624 = int_to_ptr.hbm [resolvable:$true] %s623
          %626 = dma.vmem_to_hbm [thread:$0]  %s622, 128, %s624, %s609
        $region36: #{streaming_attention_forward.1} parent=31 // pred_fallthru
          _
      $region32: #{streaming_attention_forward.1} parent=5 // pred_fallthru
        _
      %p627 = scmp.le.s32.totalorder 2, %s12
      // Predicated region
      $region37: #{streaming_attention_forward.1} parent=5 // pred_check
        %p628 = pneg %p627
      $region38: #{streaming_attention_forward.1} parent=5 // pred_check_branch
        %630 = sbr.rel (%p628) target = $region40
      $region39: #{streaming_attention_forward.1} parent=5 // pred_region
        %s631 = ssub.s32 %s12, 2
        // Predicated region
        $region41: #{streaming_attention_forward.1} parent=39 // pred_check
          %p632 = pneg %p109
        $region42: #{streaming_attention_forward.1} parent=39 // pred_check_branch
          %634 = sbr.rel (%p632) target = $region44
        $region43: #{streaming_attention_forward.1} parent=39 // pred_region
          %s635 = sand.u32 %s94, 1
          %s636 = scalar_lea.sflag [#allocation3], %s635
          %s637 = sand.u32 %s94, 1
          %s638 = smul.addr %s637, 8
          %s639 = scalar_lea.vmem [#allocation2], %s638
          %641 = dma.done %s636, 128
        $region44: #{streaming_attention_forward.1} parent=39 // pred_fallthru
          _
      $region40: #{streaming_attention_forward.1} parent=5 // pred_fallthru
        _
    $region6: #{streaming_attention_forward.1} parent=1 // loop_footer
      %s16 = sadd.s32 1, %s12
    $region7: #{streaming_attention_forward.1} parent=1 // loop_footer_branch
      %11 = sbr.rel target = $region3
    $region8: #{streaming_attention_forward.1} parent=1 // loop_exit
      _
    %642 = vsyncpa [#allocation3], 1
    %s643 = scalar_lea.sflag [#allocation3], 1
    %644 = vsyncpa %s643, 1

</llo_original>
